<compile_context>
chip_gen: v5e
topology: v5e:2x2
jax: 0.10.0
libtpu: 0.0.40
codegen_flags: <defaults>
</compile_context>

<pallas_src>
import jax
import jax.numpy as jnp
from jax.experimental import pallas as pl
from jax.experimental.pallas import tpu as pltpu

EPSILON = 1e-6
LANES = 128
SUBLANES = 8
NUM_SPLITS = 2  # leading "parallel" grid axis (exploits v7x's 2 TensorCores)


def _planarity_kernel(pts_ref, out_ref, acc_ref):
    # pts_ref: (12, tile_rows, 128) f32 VMEM tile of the relaid-out points
    # out_ref: (1, 8, 128) f32 partial-sum slab for this split
    # acc_ref: (8, 128) f32 VMEM scratch accumulator (persists across steps)
    i = pl.program_id(1)

    @pl.when(i == 0)
    def _():
        acc_ref[...] = jnp.zeros_like(acc_ref)

    pts = pts_ref[...]            # (12, tr, 128)
    tr = pts.shape[1]

    def comp(p, c):               # coordinate c of point p -> dense (tr, 128) slab
        return pts[3 * p + c]

    tile_acc = jnp.zeros((tr, LANES), jnp.float32)

    # Unroll the 4 cyclic rotations; everything is elementwise VPU work.
    for r in range(4):
        a, b, c_, d_ = r, (r + 1) % 4, (r + 2) % 4, (r + 3) % 4
        v1 = [comp(b, k) - comp(a, k) for k in range(3)]
        v2 = [comp(c_, k) - comp(a, k) for k in range(3)]
        v4 = [comp(d_, k) - comp(a, k) for k in range(3)]

        # cross(v1, v2), left unnormalized
        n0 = v1[1] * v2[2] - v1[2] * v2[1]
        n1 = v1[2] * v2[0] - v1[0] * v2[2]
        n2 = v1[0] * v2[1] - v1[1] * v2[0]

        norm = jnp.sqrt(n0 * n0 + n1 * n1 + n2 * n2) + EPSILON
        inv = pl.reciprocal(norm, approx=False)   # single exact divide / rotation
        dot = n0 * v4[0] + n1 * v4[1] + n2 * v4[2]
        d = dot * inv
        tile_acc = tile_acc + d * d

    # Fold (tr, 128) -> (8, 128) with static 8-row slices: pure VPU adds,
    # no cross-lane (XLU) work in the steady state.
    part = tile_acc[0:SUBLANES]
    for g in range(1, tr // SUBLANES):
        part = part + tile_acc[g * SUBLANES:(g + 1) * SUBLANES]
    acc_ref[...] += part

    # Last step of this split: emit the lane-dense (8, 128) partial-sum slab.
    @pl.when(i == pl.num_programs(1) - 1)
    def _():
        out_ref[...] = acc_ref[...][None]


def planarity_loss(points, *, tile_rows=None):
    """points: (B, 4, 3) float32 -> scalar float32 loss."""
    points = points.astype(jnp.float32)
    B = points.shape[0]
    # NOTE: for tiny B (hundreds or less) a pure-JAX evaluation is cheaper than
    # any kernel launch; the Pallas path is kept unconditional here so the test
    # exercises it.

    # Single fused relayout: (B, 4, 3) -> (12, B), batch on the lane axis.
    # TODO(synk): fold this relayout into the upstream data producer to avoid
    # the extra HBM round trip at very large B.
    x = points.reshape(B, 12).T  # (12, B)

    if tile_rows is None:
        rows_needed = -(-B // (NUM_SPLITS * LANES))
        tile_rows = max(SUBLANES,
                        min(512, ((rows_needed + SUBLANES - 1) // SUBLANES) * SUBLANES))
        # tile_rows=512 -> 12*512*128*4 B ~= 3.1 MiB per block (x2 buffers
        # ~= 6.3 MiB): fits default scoped VMEM on v5e/v6e/v7x.

    chunk = NUM_SPLITS * tile_rows * LANES
    b_pad = -(-B // chunk) * chunk
    if b_pad != B:
        # Zero quads contribute exactly 0 to the accumulated sum.
        x = jnp.pad(x, ((0, 0), (0, b_pad - B)))

    nb = b_pad // LANES                       # rows of 128 quads
    x = x.reshape(12, nb, LANES)
    tiles_per_split = nb // (NUM_SPLITS * tile_rows)

    partials = pl.pallas_call(
        _planarity_kernel,
        out_shape=jax.ShapeDtypeStruct((NUM_SPLITS, SUBLANES, LANES), jnp.float32),
        grid_spec=pltpu.PrefetchScalarGridSpec(
            num_scalar_prefetch=0,
            grid=(NUM_SPLITS, tiles_per_split),
            in_specs=[pl.BlockSpec(
                (12, tile_rows, LANES),
                lambda s, i: (0, s * tiles_per_split + i, 0))],
            out_specs=pl.BlockSpec(
                (1, SUBLANES, LANES),
                lambda s, i: (s, 0, 0)),
            scratch_shapes=[pltpu.VMEM((SUBLANES, LANES), jnp.float32)],
        ),
        compiler_params=pltpu.CompilerParams(
            dimension_semantics=("parallel", "arbitrary")),
    )(x)

    # Tiny final reduction + normalization (sum of 4 rotations per quad -> /4,
    # then mean over the TRUE batch size, not the padded one).
    return jnp.sum(partials) / (4.0 * B)


def _planarity_loss_ref(points):
    """Pure-JAX reference mirroring the PyTorch module."""
    def compute(p1, p2, p3, p4):
        v1 = p2 - p1
        v2 = p3 - p1
        normal = jnp.cross(v1, v2)
        normal = normal / (jnp.linalg.norm(normal, axis=1, keepdims=True) + EPSILON)
        v4 = p4 - p1
        dot = jnp.sum(normal * v4, axis=1)
        return dot ** 2

    loss = (compute(points[:, 0], points[:, 1], points[:, 2], points[:, 3])
            + compute(points[:, 1], points[:, 2], points[:, 3], points[:, 0])
            + compute(points[:, 2], points[:, 3], points[:, 0], points[:, 1])
            + compute(points[:, 3], points[:, 0], points[:, 1], points[:, 2])) / 4.0
    return jnp.mean(loss)


if __name__ == "__main__":
    key = jax.random.PRNGKey(0)

    # Small shape consistent with the module (B quads of 4 xyz points).
    B = 8
    points = jax.random.normal(key, (B, 4, 3), dtype=jnp.float32)
    out = jax.block_until_ready(planarity_loss(points))
    ref = jax.block_until_ready(_planarity_loss_ref(points))
    assert jnp.allclose(out, ref, rtol=1e-5, atol=1e-6), (out, ref)

    # Second check exercising the multi-step accumulator + tail padding path.
    B2 = 5000
    points2 = jax.random.normal(jax.random.PRNGKey(1), (B2, 4, 3), dtype=jnp.float32)
    out2 = jax.block_until_ready(planarity_loss(points2, tile_rows=8))
    ref2 = jax.block_until_ready(_planarity_loss_ref(points2))
    assert jnp.allclose(out2, ref2, rtol=1e-5, atol=1e-6), (out2, ref2)

    print("KERNEL_OK")
</pallas_src>

<mosaic_0001>
module attributes {stable_mosaic.version = 11 : i64} {
  func.func @_planarity_kernel(%arg0: i32, %arg1: i32, %arg2: memref<12x8x128xf32, #tpu.memory_space<vmem>>, %arg3: memref<1x8x128xf32, #tpu.memory_space<vmem>>, %arg4: memref<8x128xf32, #tpu.memory_space<vmem>>) attributes {dimension_semantics = [#tpu.dimension_semantics<parallel>, #tpu.dimension_semantics<arbitrary>], iteration_bounds = array<i64: 2, 1>, scalar_prefetch = 0 : i64, scratch_operands = 1 : i64, tpu.core_type = #tpu.core_type<tc>, window_params = [{transform_indices = @transform_0, window_bounds = array<i64: 12, 8, 128>}, {transform_indices = @transform_1, window_bounds = array<i64: 1, 8, 128>}]} {
    %c0_i32 = arith.constant 0 : i32
    %0 = arith.cmpi eq, %arg1, %c0_i32 : i32
    %1 = arith.extui %0 : i1 to i32
    %c0_i32_0 = arith.constant 0 : i32
    %2 = arith.cmpi ne, %1, %c0_i32_0 : i32
    scf.if %2 {
      %cst_13 = arith.constant 0.000000e+00 : f32
      %295 = vector.broadcast %cst_13 : f32 to vector<8x128xf32>
      %c0_14 = arith.constant 0 : index
      %c0_15 = arith.constant 0 : index
      %296 = vector.load %arg4[%c0_14, %c0_15] : memref<8x128xf32, #tpu.memory_space<vmem>>, vector<8x128xf32>
      tpu.vector_store %arg4[%c0_14, %c0_15], %295 {strides = array<i32>} : memref<8x128xf32, #tpu.memory_space<vmem>>, vector<8x128xf32>,
    } else {
    }
    %c0 = arith.constant 0 : index
    %c0_1 = arith.constant 0 : index
    %c0_2 = arith.constant 0 : index
    %3 = vector.load %arg2[%c0, %c0_1, %c0_2] : memref<12x8x128xf32, #tpu.memory_space<vmem>>, vector<12x8x128xf32>
    %cst = arith.constant 0.000000e+00 : f32
    %4 = vector.broadcast %cst : f32 to vector<8x128xf32>
    %5 = vector.extract_strided_slice %3 {offsets = [3, 0, 0], sizes = [1, 8, 128], strides = [1, 1, 1]} : vector<12x8x128xf32> to vector<1x8x128xf32>
    %6 = vector.shape_cast %5 : vector<1x8x128xf32> to vector<8x128xf32>
    %7 = vector.extract_strided_slice %3 {offsets = [0, 0, 0], sizes = [1, 8, 128], strides = [1, 1, 1]} : vector<12x8x128xf32> to vector<1x8x128xf32>
    %8 = vector.shape_cast %7 : vector<1x8x128xf32> to vector<8x128xf32>
    %9 = arith.subf %6, %8 : vector<8x128xf32>
    %10 = vector.extract_strided_slice %3 {offsets = [4, 0, 0], sizes = [1, 8, 128], strides = [1, 1, 1]} : vector<12x8x128xf32> to vector<1x8x128xf32>
    %11 = vector.shape_cast %10 : vector<1x8x128xf32> to vector<8x128xf32>
    %12 = vector.extract_strided_slice %3 {offsets = [1, 0, 0], sizes = [1, 8, 128], strides = [1, 1, 1]} : vector<12x8x128xf32> to vector<1x8x128xf32>
    %13 = vector.shape_cast %12 : vector<1x8x128xf32> to vector<8x128xf32>
    %14 = arith.subf %11, %13 : vector<8x128xf32>
    %15 = vector.extract_strided_slice %3 {offsets = [5, 0, 0], sizes = [1, 8, 128], strides = [1, 1, 1]} : vector<12x8x128xf32> to vector<1x8x128xf32>
    %16 = vector.shape_cast %15 : vector<1x8x128xf32> to vector<8x128xf32>
    %17 = vector.extract_strided_slice %3 {offsets = [2, 0, 0], sizes = [1, 8, 128], strides = [1, 1, 1]} : vector<12x8x128xf32> to vector<1x8x128xf32>
    %18 = vector.shape_cast %17 : vector<1x8x128xf32> to vector<8x128xf32>
    %19 = arith.subf %16, %18 : vector<8x128xf32>
    %20 = vector.extract_strided_slice %3 {offsets = [6, 0, 0], sizes = [1, 8, 128], strides = [1, 1, 1]} : vector<12x8x128xf32> to vector<1x8x128xf32>
    %21 = vector.shape_cast %20 : vector<1x8x128xf32> to vector<8x128xf32>
    %22 = vector.extract_strided_slice %3 {offsets = [0, 0, 0], sizes = [1, 8, 128], strides = [1, 1, 1]} : vector<12x8x128xf32> to vector<1x8x128xf32>
    %23 = vector.shape_cast %22 : vector<1x8x128xf32> to vector<8x128xf32>
    %24 = arith.subf %21, %23 : vector<8x128xf32>
    %25 = vector.extract_strided_slice %3 {offsets = [7, 0, 0], sizes = [1, 8, 128], strides = [1, 1, 1]} : vector<12x8x128xf32> to vector<1x8x128xf32>
    %26 = vector.shape_cast %25 : vector<1x8x128xf32> to vector<8x128xf32>
    %27 = vector.extract_strided_slice %3 {offsets = [1, 0, 0], sizes = [1, 8, 128], strides = [1, 1, 1]} : vector<12x8x128xf32> to vector<1x8x128xf32>
    %28 = vector.shape_cast %27 : vector<1x8x128xf32> to vector<8x128xf32>
    %29 = arith.subf %26, %28 : vector<8x128xf32>
    %30 = vector.extract_strided_slice %3 {offsets = [8, 0, 0], sizes = [1, 8, 128], strides = [1, 1, 1]} : vector<12x8x128xf32> to vector<1x8x128xf32>
    %31 = vector.shape_cast %30 : vector<1x8x128xf32> to vector<8x128xf32>
    %32 = vector.extract_strided_slice %3 {offsets = [2, 0, 0], sizes = [1, 8, 128], strides = [1, 1, 1]} : vector<12x8x128xf32> to vector<1x8x128xf32>
    %33 = vector.shape_cast %32 : vector<1x8x128xf32> to vector<8x128xf32>
    %34 = arith.subf %31, %33 : vector<8x128xf32>
    %35 = vector.extract_strided_slice %3 {offsets = [9, 0, 0], sizes = [1, 8, 128], strides = [1, 1, 1]} : vector<12x8x128xf32> to vector<1x8x128xf32>
    %36 = vector.shape_cast %35 : vector<1x8x128xf32> to vector<8x128xf32>
    %37 = vector.extract_strided_slice %3 {offsets = [0, 0, 0], sizes = [1, 8, 128], strides = [1, 1, 1]} : vector<12x8x128xf32> to vector<1x8x128xf32>
    %38 = vector.shape_cast %37 : vector<1x8x128xf32> to vector<8x128xf32>
    %39 = arith.subf %36, %38 : vector<8x128xf32>
    %40 = vector.extract_strided_slice %3 {offsets = [10, 0, 0], sizes = [1, 8, 128], strides = [1, 1, 1]} : vector<12x8x128xf32> to vector<1x8x128xf32>
    %41 = vector.shape_cast %40 : vector<1x8x128xf32> to vector<8x128xf32>
    %42 = vector.extract_strided_slice %3 {offsets = [1, 0, 0], sizes = [1, 8, 128], strides = [1, 1, 1]} : vector<12x8x128xf32> to vector<1x8x128xf32>
    %43 = vector.shape_cast %42 : vector<1x8x128xf32> to vector<8x128xf32>
    %44 = arith.subf %41, %43 : vector<8x128xf32>
    %45 = vector.extract_strided_slice %3 {offsets = [11, 0, 0], sizes = [1, 8, 128], strides = [1, 1, 1]} : vector<12x8x128xf32> to vector<1x8x128xf32>
    %46 = vector.shape_cast %45 : vector<1x8x128xf32> to vector<8x128xf32>
    %47 = vector.extract_strided_slice %3 {offsets = [2, 0, 0], sizes = [1, 8, 128], strides = [1, 1, 1]} : vector<12x8x128xf32> to vector<1x8x128xf32>
    %48 = vector.shape_cast %47 : vector<1x8x128xf32> to vector<8x128xf32>
    %49 = arith.subf %46, %48 : vector<8x128xf32>
    %50 = arith.mulf %14, %34 : vector<8x128xf32>
    %51 = arith.mulf %19, %29 : vector<8x128xf32>
    %52 = arith.subf %50, %51 : vector<8x128xf32>
    %53 = arith.mulf %19, %24 : vector<8x128xf32>
    %54 = arith.mulf %9, %34 : vector<8x128xf32>
    %55 = arith.subf %53, %54 : vector<8x128xf32>
    %56 = arith.mulf %9, %29 : vector<8x128xf32>
    %57 = arith.mulf %14, %24 : vector<8x128xf32>
    %58 = arith.subf %56, %57 : vector<8x128xf32>
    %59 = arith.mulf %52, %52 : vector<8x128xf32>
    %60 = arith.mulf %55, %55 : vector<8x128xf32>
    %61 = arith.addf %59, %60 : vector<8x128xf32>
    %62 = arith.mulf %58, %58 : vector<8x128xf32>
    %63 = arith.addf %61, %62 : vector<8x128xf32>
    %64 = math.sqrt %63 : vector<8x128xf32>
    %cst_3 = arith.constant 9.99999997E-7 : f32
    %65 = vector.broadcast %cst_3 : f32 to vector<8x128xf32>
    %66 = arith.addf %64, %65 : vector<8x128xf32>
    %67 = tpu.reciprocal %66 : vector<8x128xf32> -> vector<8x128xf32>
    %68 = arith.mulf %52, %39 : vector<8x128xf32>
    %69 = arith.mulf %55, %44 : vector<8x128xf32>
    %70 = arith.addf %68, %69 : vector<8x128xf32>
    %71 = arith.mulf %58, %49 : vector<8x128xf32>
    %72 = arith.addf %70, %71 : vector<8x128xf32>
    %73 = arith.mulf %72, %67 : vector<8x128xf32>
    %74 = arith.mulf %73, %73 : vector<8x128xf32>
    %75 = arith.addf %4, %74 : vector<8x128xf32>
    %76 = vector.extract_strided_slice %3 {offsets = [6, 0, 0], sizes = [1, 8, 128], strides = [1, 1, 1]} : vector<12x8x128xf32> to vector<1x8x128xf32>
    %77 = vector.shape_cast %76 : vector<1x8x128xf32> to vector<8x128xf32>
    %78 = vector.extract_strided_slice %3 {offsets = [3, 0, 0], sizes = [1, 8, 128], strides = [1, 1, 1]} : vector<12x8x128xf32> to vector<1x8x128xf32>
    %79 = vector.shape_cast %78 : vector<1x8x128xf32> to vector<8x128xf32>
    %80 = arith.subf %77, %79 : vector<8x128xf32>
    %81 = vector.extract_strided_slice %3 {offsets = [7, 0, 0], sizes = [1, 8, 128], strides = [1, 1, 1]} : vector<12x8x128xf32> to vector<1x8x128xf32>
    %82 = vector.shape_cast %81 : vector<1x8x128xf32> to vector<8x128xf32>
    %83 = vector.extract_strided_slice %3 {offsets = [4, 0, 0], sizes = [1, 8, 128], strides = [1, 1, 1]} : vector<12x8x128xf32> to vector<1x8x128xf32>
    %84 = vector.shape_cast %83 : vector<1x8x128xf32> to vector<8x128xf32>
    %85 = arith.subf %82, %84 : vector<8x128xf32>
    %86 = vector.extract_strided_slice %3 {offsets = [8, 0, 0], sizes = [1, 8, 128], strides = [1, 1, 1]} : vector<12x8x128xf32> to vector<1x8x128xf32>
    %87 = vector.shape_cast %86 : vector<1x8x128xf32> to vector<8x128xf32>
    %88 = vector.extract_strided_slice %3 {offsets = [5, 0, 0], sizes = [1, 8, 128], strides = [1, 1, 1]} : vector<12x8x128xf32> to vector<1x8x128xf32>
    %89 = vector.shape_cast %88 : vector<1x8x128xf32> to vector<8x128xf32>
    %90 = arith.subf %87, %89 : vector<8x128xf32>
    %91 = vector.extract_strided_slice %3 {offsets = [9, 0, 0], sizes = [1, 8, 128], strides = [1, 1, 1]} : vector<12x8x128xf32> to vector<1x8x128xf32>
    %92 = vector.shape_cast %91 : vector<1x8x128xf32> to vector<8x128xf32>
    %93 = vector.extract_strided_slice %3 {offsets = [3, 0, 0], sizes = [1, 8, 128], strides = [1, 1, 1]} : vector<12x8x128xf32> to vector<1x8x128xf32>
    %94 = vector.shape_cast %93 : vector<1x8x128xf32> to vector<8x128xf32>
    %95 = arith.subf %92, %94 : vector<8x128xf32>
    %96 = vector.extract_strided_slice %3 {offsets = [10, 0, 0], sizes = [1, 8, 128], strides = [1, 1, 1]} : vector<12x8x128xf32> to vector<1x8x128xf32>
    %97 = vector.shape_cast %96 : vector<1x8x128xf32> to vector<8x128xf32>
    %98 = vector.extract_strided_slice %3 {offsets = [4, 0, 0], sizes = [1, 8, 128], strides = [1, 1, 1]} : vector<12x8x128xf32> to vector<1x8x128xf32>
    %99 = vector.shape_cast %98 : vector<1x8x128xf32> to vector<8x128xf32>
    %100 = arith.subf %97, %99 : vector<8x128xf32>
    %101 = vector.extract_strided_slice %3 {offsets = [11, 0, 0], sizes = [1, 8, 128], strides = [1, 1, 1]} : vector<12x8x128xf32> to vector<1x8x128xf32>
    %102 = vector.shape_cast %101 : vector<1x8x128xf32> to vector<8x128xf32>
    %103 = vector.extract_strided_slice %3 {offsets = [5, 0, 0], sizes = [1, 8, 128], strides = [1, 1, 1]} : vector<12x8x128xf32> to vector<1x8x128xf32>
    %104 = vector.shape_cast %103 : vector<1x8x128xf32> to vector<8x128xf32>
    %105 = arith.subf %102, %104 : vector<8x128xf32>
    %106 = vector.extract_strided_slice %3 {offsets = [0, 0, 0], sizes = [1, 8, 128], strides = [1, 1, 1]} : vector<12x8x128xf32> to vector<1x8x128xf32>
    %107 = vector.shape_cast %106 : vector<1x8x128xf32> to vector<8x128xf32>
    %108 = vector.extract_strided_slice %3 {offsets = [3, 0, 0], sizes = [1, 8, 128], strides = [1, 1, 1]} : vector<12x8x128xf32> to vector<1x8x128xf32>
    %109 = vector.shape_cast %108 : vector<1x8x128xf32> to vector<8x128xf32>
    %110 = arith.subf %107, %109 : vector<8x128xf32>
    %111 = vector.extract_strided_slice %3 {offsets = [1, 0, 0], sizes = [1, 8, 128], strides = [1, 1, 1]} : vector<12x8x128xf32> to vector<1x8x128xf32>
    %112 = vector.shape_cast %111 : vector<1x8x128xf32> to vector<8x128xf32>
    %113 = vector.extract_strided_slice %3 {offsets = [4, 0, 0], sizes = [1, 8, 128], strides = [1, 1, 1]} : vector<12x8x128xf32> to vector<1x8x128xf32>
    %114 = vector.shape_cast %113 : vector<1x8x128xf32> to vector<8x128xf32>
    %115 = arith.subf %112, %114 : vector<8x128xf32>
    %116 = vector.extract_strided_slice %3 {offsets = [2, 0, 0], sizes = [1, 8, 128], strides = [1, 1, 1]} : vector<12x8x128xf32> to vector<1x8x128xf32>
    %117 = vector.shape_cast %116 : vector<1x8x128xf32> to vector<8x128xf32>
    %118 = vector.extract_strided_slice %3 {offsets = [5, 0, 0], sizes = [1, 8, 128], strides = [1, 1, 1]} : vector<12x8x128xf32> to vector<1x8x128xf32>
    %119 = vector.shape_cast %118 : vector<1x8x128xf32> to vector<8x128xf32>
    %120 = arith.subf %117, %119 : vector<8x128xf32>
    %121 = arith.mulf %85, %105 : vector<8x128xf32>
    %122 = arith.mulf %90, %100 : vector<8x128xf32>
    %123 = arith.subf %121, %122 : vector<8x128xf32>
    %124 = arith.mulf %90, %95 : vector<8x128xf32>
    %125 = arith.mulf %80, %105 : vector<8x128xf32>
    %126 = arith.subf %124, %125 : vector<8x128xf32>
    %127 = arith.mulf %80, %100 : vector<8x128xf32>
    %128 = arith.mulf %85, %95 : vector<8x128xf32>
    %129 = arith.subf %127, %128 : vector<8x128xf32>
    %130 = arith.mulf %123, %123 : vector<8x128xf32>
    %131 = arith.mulf %126, %126 : vector<8x128xf32>
    %132 = arith.addf %130, %131 : vector<8x128xf32>
    %133 = arith.mulf %129, %129 : vector<8x128xf32>
    %134 = arith.addf %132, %133 : vector<8x128xf32>
    %135 = math.sqrt %134 : vector<8x128xf32>
    %cst_4 = arith.constant 9.99999997E-7 : f32
    %136 = vector.broadcast %cst_4 : f32 to vector<8x128xf32>
    %137 = arith.addf %135, %136 : vector<8x128xf32>
    %138 = tpu.reciprocal %137 : vector<8x128xf32> -> vector<8x128xf32>
    %139 = arith.mulf %123, %110 : vector<8x128xf32>
    %140 = arith.mulf %126, %115 : vector<8x128xf32>
    %141 = arith.addf %139, %140 : vector<8x128xf32>
    %142 = arith.mulf %129, %120 : vector<8x128xf32>
    %143 = arith.addf %141, %142 : vector<8x128xf32>
    %144 = arith.mulf %143, %138 : vector<8x128xf32>
    %145 = arith.mulf %144, %144 : vector<8x128xf32>
    %146 = arith.addf %75, %145 : vector<8x128xf32>
    %147 = vector.extract_strided_slice %3 {offsets = [9, 0, 0], sizes = [1, 8, 128], strides = [1, 1, 1]} : vector<12x8x128xf32> to vector<1x8x128xf32>
    %148 = vector.shape_cast %147 : vector<1x8x128xf32> to vector<8x128xf32>
    %149 = vector.extract_strided_slice %3 {offsets = [6, 0, 0], sizes = [1, 8, 128], strides = [1, 1, 1]} : vector<12x8x128xf32> to vector<1x8x128xf32>
    %150 = vector.shape_cast %149 : vector<1x8x128xf32> to vector<8x128xf32>
    %151 = arith.subf %148, %150 : vector<8x128xf32>
    %152 = vector.extract_strided_slice %3 {offsets = [10, 0, 0], sizes = [1, 8, 128], strides = [1, 1, 1]} : vector<12x8x128xf32> to vector<1x8x128xf32>
    %153 = vector.shape_cast %152 : vector<1x8x128xf32> to vector<8x128xf32>
    %154 = vector.extract_strided_slice %3 {offsets = [7, 0, 0], sizes = [1, 8, 128], strides = [1, 1, 1]} : vector<12x8x128xf32> to vector<1x8x128xf32>
    %155 = vector.shape_cast %154 : vector<1x8x128xf32> to vector<8x128xf32>
    %156 = arith.subf %153, %155 : vector<8x128xf32>
    %157 = vector.extract_strided_slice %3 {offsets = [11, 0, 0], sizes = [1, 8, 128], strides = [1, 1, 1]} : vector<12x8x128xf32> to vector<1x8x128xf32>
    %158 = vector.shape_cast %157 : vector<1x8x128xf32> to vector<8x128xf32>
    %159 = vector.extract_strided_slice %3 {offsets = [8, 0, 0], sizes = [1, 8, 128], strides = [1, 1, 1]} : vector<12x8x128xf32> to vector<1x8x128xf32>
    %160 = vector.shape_cast %159 : vector<1x8x128xf32> to vector<8x128xf32>
    %161 = arith.subf %158, %160 : vector<8x128xf32>
    %162 = vector.extract_strided_slice %3 {offsets = [0, 0, 0], sizes = [1, 8, 128], strides = [1, 1, 1]} : vector<12x8x128xf32> to vector<1x8x128xf32>
    %163 = vector.shape_cast %162 : vector<1x8x128xf32> to vector<8x128xf32>
    %164 = vector.extract_strided_slice %3 {offsets = [6, 0, 0], sizes = [1, 8, 128], strides = [1, 1, 1]} : vector<12x8x128xf32> to vector<1x8x128xf32>
    %165 = vector.shape_cast %164 : vector<1x8x128xf32> to vector<8x128xf32>
    %166 = arith.subf %163, %165 : vector<8x128xf32>
    %167 = vector.extract_strided_slice %3 {offsets = [1, 0, 0], sizes = [1, 8, 128], strides = [1, 1, 1]} : vector<12x8x128xf32> to vector<1x8x128xf32>
    %168 = vector.shape_cast %167 : vector<1x8x128xf32> to vector<8x128xf32>
    %169 = vector.extract_strided_slice %3 {offsets = [7, 0, 0], sizes = [1, 8, 128], strides = [1, 1, 1]} : vector<12x8x128xf32> to vector<1x8x128xf32>
    %170 = vector.shape_cast %169 : vector<1x8x128xf32> to vector<8x128xf32>
    %171 = arith.subf %168, %170 : vector<8x128xf32>
    %172 = vector.extract_strided_slice %3 {offsets = [2, 0, 0], sizes = [1, 8, 128], strides = [1, 1, 1]} : vector<12x8x128xf32> to vector<1x8x128xf32>
    %173 = vector.shape_cast %172 : vector<1x8x128xf32> to vector<8x128xf32>
    %174 = vector.extract_strided_slice %3 {offsets = [8, 0, 0], sizes = [1, 8, 128], strides = [1, 1, 1]} : vector<12x8x128xf32> to vector<1x8x128xf32>
    %175 = vector.shape_cast %174 : vector<1x8x128xf32> to vector<8x128xf32>
    %176 = arith.subf %173, %175 : vector<8x128xf32>
    %177 = vector.extract_strided_slice %3 {offsets = [3, 0, 0], sizes = [1, 8, 128], strides = [1, 1, 1]} : vector<12x8x128xf32> to vector<1x8x128xf32>
    %178 = vector.shape_cast %177 : vector<1x8x128xf32> to vector<8x128xf32>
    %179 = vector.extract_strided_slice %3 {offsets = [6, 0, 0], sizes = [1, 8, 128], strides = [1, 1, 1]} : vector<12x8x128xf32> to vector<1x8x128xf32>
    %180 = vector.shape_cast %179 : vector<1x8x128xf32> to vector<8x128xf32>
    %181 = arith.subf %178, %180 : vector<8x128xf32>
    %182 = vector.extract_strided_slice %3 {offsets = [4, 0, 0], sizes = [1, 8, 128], strides = [1, 1, 1]} : vector<12x8x128xf32> to vector<1x8x128xf32>
    %183 = vector.shape_cast %182 : vector<1x8x128xf32> to vector<8x128xf32>
    %184 = vector.extract_strided_slice %3 {offsets = [7, 0, 0], sizes = [1, 8, 128], strides = [1, 1, 1]} : vector<12x8x128xf32> to vector<1x8x128xf32>
    %185 = vector.shape_cast %184 : vector<1x8x128xf32> to vector<8x128xf32>
    %186 = arith.subf %183, %185 : vector<8x128xf32>
    %187 = vector.extract_strided_slice %3 {offsets = [5, 0, 0], sizes = [1, 8, 128], strides = [1, 1, 1]} : vector<12x8x128xf32> to vector<1x8x128xf32>
    %188 = vector.shape_cast %187 : vector<1x8x128xf32> to vector<8x128xf32>
    %189 = vector.extract_strided_slice %3 {offsets = [8, 0, 0], sizes = [1, 8, 128], strides = [1, 1, 1]} : vector<12x8x128xf32> to vector<1x8x128xf32>
    %190 = vector.shape_cast %189 : vector<1x8x128xf32> to vector<8x128xf32>
    %191 = arith.subf %188, %190 : vector<8x128xf32>
    %192 = arith.mulf %156, %176 : vector<8x128xf32>
    %193 = arith.mulf %161, %171 : vector<8x128xf32>
    %194 = arith.subf %192, %193 : vector<8x128xf32>
    %195 = arith.mulf %161, %166 : vector<8x128xf32>
    %196 = arith.mulf %151, %176 : vector<8x128xf32>
    %197 = arith.subf %195, %196 : vector<8x128xf32>
    %198 = arith.mulf %151, %171 : vector<8x128xf32>
    %199 = arith.mulf %156, %166 : vector<8x128xf32>
    %200 = arith.subf %198, %199 : vector<8x128xf32>
    %201 = arith.mulf %194, %194 : vector<8x128xf32>
    %202 = arith.mulf %197, %197 : vector<8x128xf32>
    %203 = arith.addf %201, %202 : vector<8x128xf32>
    %204 = arith.mulf %200, %200 : vector<8x128xf32>
    %205 = arith.addf %203, %204 : vector<8x128xf32>
    %206 = math.sqrt %205 : vector<8x128xf32>
    %cst_5 = arith.constant 9.99999997E-7 : f32
    %207 = vector.broadcast %cst_5 : f32 to vector<8x128xf32>
    %208 = arith.addf %206, %207 : vector<8x128xf32>
    %209 = tpu.reciprocal %208 : vector<8x128xf32> -> vector<8x128xf32>
    %210 = arith.mulf %194, %181 : vector<8x128xf32>
    %211 = arith.mulf %197, %186 : vector<8x128xf32>
    %212 = arith.addf %210, %211 : vector<8x128xf32>
    %213 = arith.mulf %200, %191 : vector<8x128xf32>
    %214 = arith.addf %212, %213 : vector<8x128xf32>
    %215 = arith.mulf %214, %209 : vector<8x128xf32>
    %216 = arith.mulf %215, %215 : vector<8x128xf32>
    %217 = arith.addf %146, %216 : vector<8x128xf32>
    %218 = vector.extract_strided_slice %3 {offsets = [0, 0, 0], sizes = [1, 8, 128], strides = [1, 1, 1]} : vector<12x8x128xf32> to vector<1x8x128xf32>
    %219 = vector.shape_cast %218 : vector<1x8x128xf32> to vector<8x128xf32>
    %220 = vector.extract_strided_slice %3 {offsets = [9, 0, 0], sizes = [1, 8, 128], strides = [1, 1, 1]} : vector<12x8x128xf32> to vector<1x8x128xf32>
    %221 = vector.shape_cast %220 : vector<1x8x128xf32> to vector<8x128xf32>
    %222 = arith.subf %219, %221 : vector<8x128xf32>
    %223 = vector.extract_strided_slice %3 {offsets = [1, 0, 0], sizes = [1, 8, 128], strides = [1, 1, 1]} : vector<12x8x128xf32> to vector<1x8x128xf32>
    %224 = vector.shape_cast %223 : vector<1x8x128xf32> to vector<8x128xf32>
    %225 = vector.extract_strided_slice %3 {offsets = [10, 0, 0], sizes = [1, 8, 128], strides = [1, 1, 1]} : vector<12x8x128xf32> to vector<1x8x128xf32>
    %226 = vector.shape_cast %225 : vector<1x8x128xf32> to vector<8x128xf32>
    %227 = arith.subf %224, %226 : vector<8x128xf32>
    %228 = vector.extract_strided_slice %3 {offsets = [2, 0, 0], sizes = [1, 8, 128], strides = [1, 1, 1]} : vector<12x8x128xf32> to vector<1x8x128xf32>
    %229 = vector.shape_cast %228 : vector<1x8x128xf32> to vector<8x128xf32>
    %230 = vector.extract_strided_slice %3 {offsets = [11, 0, 0], sizes = [1, 8, 128], strides = [1, 1, 1]} : vector<12x8x128xf32> to vector<1x8x128xf32>
    %231 = vector.shape_cast %230 : vector<1x8x128xf32> to vector<8x128xf32>
    %232 = arith.subf %229, %231 : vector<8x128xf32>
    %233 = vector.extract_strided_slice %3 {offsets = [3, 0, 0], sizes = [1, 8, 128], strides = [1, 1, 1]} : vector<12x8x128xf32> to vector<1x8x128xf32>
    %234 = vector.shape_cast %233 : vector<1x8x128xf32> to vector<8x128xf32>
    %235 = vector.extract_strided_slice %3 {offsets = [9, 0, 0], sizes = [1, 8, 128], strides = [1, 1, 1]} : vector<12x8x128xf32> to vector<1x8x128xf32>
    %236 = vector.shape_cast %235 : vector<1x8x128xf32> to vector<8x128xf32>
    %237 = arith.subf %234, %236 : vector<8x128xf32>
    %238 = vector.extract_strided_slice %3 {offsets = [4, 0, 0], sizes = [1, 8, 128], strides = [1, 1, 1]} : vector<12x8x128xf32> to vector<1x8x128xf32>
    %239 = vector.shape_cast %238 : vector<1x8x128xf32> to vector<8x128xf32>
    %240 = vector.extract_strided_slice %3 {offsets = [10, 0, 0], sizes = [1, 8, 128], strides = [1, 1, 1]} : vector<12x8x128xf32> to vector<1x8x128xf32>
    %241 = vector.shape_cast %240 : vector<1x8x128xf32> to vector<8x128xf32>
    %242 = arith.subf %239, %241 : vector<8x128xf32>
    %243 = vector.extract_strided_slice %3 {offsets = [5, 0, 0], sizes = [1, 8, 128], strides = [1, 1, 1]} : vector<12x8x128xf32> to vector<1x8x128xf32>
    %244 = vector.shape_cast %243 : vector<1x8x128xf32> to vector<8x128xf32>
    %245 = vector.extract_strided_slice %3 {offsets = [11, 0, 0], sizes = [1, 8, 128], strides = [1, 1, 1]} : vector<12x8x128xf32> to vector<1x8x128xf32>
    %246 = vector.shape_cast %245 : vector<1x8x128xf32> to vector<8x128xf32>
    %247 = arith.subf %244, %246 : vector<8x128xf32>
    %248 = vector.extract_strided_slice %3 {offsets = [6, 0, 0], sizes = [1, 8, 128], strides = [1, 1, 1]} : vector<12x8x128xf32> to vector<1x8x128xf32>
    %249 = vector.shape_cast %248 : vector<1x8x128xf32> to vector<8x128xf32>
    %250 = vector.extract_strided_slice %3 {offsets = [9, 0, 0], sizes = [1, 8, 128], strides = [1, 1, 1]} : vector<12x8x128xf32> to vector<1x8x128xf32>
    %251 = vector.shape_cast %250 : vector<1x8x128xf32> to vector<8x128xf32>
    %252 = arith.subf %249, %251 : vector<8x128xf32>
    %253 = vector.extract_strided_slice %3 {offsets = [7, 0, 0], sizes = [1, 8, 128], strides = [1, 1, 1]} : vector<12x8x128xf32> to vector<1x8x128xf32>
    %254 = vector.shape_cast %253 : vector<1x8x128xf32> to vector<8x128xf32>
    %255 = vector.extract_strided_slice %3 {offsets = [10, 0, 0], sizes = [1, 8, 128], strides = [1, 1, 1]} : vector<12x8x128xf32> to vector<1x8x128xf32>
    %256 = vector.shape_cast %255 : vector<1x8x128xf32> to vector<8x128xf32>
    %257 = arith.subf %254, %256 : vector<8x128xf32>
    %258 = vector.extract_strided_slice %3 {offsets = [8, 0, 0], sizes = [1, 8, 128], strides = [1, 1, 1]} : vector<12x8x128xf32> to vector<1x8x128xf32>
    %259 = vector.shape_cast %258 : vector<1x8x128xf32> to vector<8x128xf32>
    %260 = vector.extract_strided_slice %3 {offsets = [11, 0, 0], sizes = [1, 8, 128], strides = [1, 1, 1]} : vector<12x8x128xf32> to vector<1x8x128xf32>
    %261 = vector.shape_cast %260 : vector<1x8x128xf32> to vector<8x128xf32>
    %262 = arith.subf %259, %261 : vector<8x128xf32>
    %263 = arith.mulf %227, %247 : vector<8x128xf32>
    %264 = arith.mulf %232, %242 : vector<8x128xf32>
    %265 = arith.subf %263, %264 : vector<8x128xf32>
    %266 = arith.mulf %232, %237 : vector<8x128xf32>
    %267 = arith.mulf %222, %247 : vector<8x128xf32>
    %268 = arith.subf %266, %267 : vector<8x128xf32>
    %269 = arith.mulf %222, %242 : vector<8x128xf32>
    %270 = arith.mulf %227, %237 : vector<8x128xf32>
    %271 = arith.subf %269, %270 : vector<8x128xf32>
    %272 = arith.mulf %265, %265 : vector<8x128xf32>
    %273 = arith.mulf %268, %268 : vector<8x128xf32>
    %274 = arith.addf %272, %273 : vector<8x128xf32>
    %275 = arith.mulf %271, %271 : vector<8x128xf32>
    %276 = arith.addf %274, %275 : vector<8x128xf32>
    %277 = math.sqrt %276 : vector<8x128xf32>
    %cst_6 = arith.constant 9.99999997E-7 : f32
    %278 = vector.broadcast %cst_6 : f32 to vector<8x128xf32>
    %279 = arith.addf %277, %278 : vector<8x128xf32>
    %280 = tpu.reciprocal %279 : vector<8x128xf32> -> vector<8x128xf32>
    %281 = arith.mulf %265, %252 : vector<8x128xf32>
    %282 = arith.mulf %268, %257 : vector<8x128xf32>
    %283 = arith.addf %281, %282 : vector<8x128xf32>
    %284 = arith.mulf %271, %262 : vector<8x128xf32>
    %285 = arith.addf %283, %284 : vector<8x128xf32>
    %286 = arith.mulf %285, %280 : vector<8x128xf32>
    %287 = arith.mulf %286, %286 : vector<8x128xf32>
    %288 = arith.addf %217, %287 : vector<8x128xf32>
    %c0_7 = arith.constant 0 : index
    %c0_8 = arith.constant 0 : index
    %289 = vector.load %arg4[%c0_7, %c0_8] : memref<8x128xf32, #tpu.memory_space<vmem>>, vector<8x128xf32>
    %290 = arith.addf %289, %288 : vector<8x128xf32>
    %c0_9 = arith.constant 0 : index
    %c0_10 = arith.constant 0 : index
    %291 = vector.load %arg4[%c0_9, %c0_10] : memref<8x128xf32, #tpu.memory_space<vmem>>, vector<8x128xf32>
    tpu.vector_store %arg4[%c0_9, %c0_10], %290 {strides = array<i32>} : memref<8x128xf32, #tpu.memory_space<vmem>>, vector<8x128xf32>,
    %c0_i32_11 = arith.constant 0 : i32
    %292 = arith.cmpi eq, %arg1, %c0_i32_11 : i32
    %293 = arith.extui %292 : i1 to i32
    %c0_i32_12 = arith.constant 0 : i32
    %294 = arith.cmpi ne, %293, %c0_i32_12 : i32
    scf.if %294 {
      %c0_13 = arith.constant 0 : index
      %c0_14 = arith.constant 0 : index
      %295 = vector.load %arg4[%c0_13, %c0_14] : memref<8x128xf32, #tpu.memory_space<vmem>>, vector<8x128xf32>
      %296 = vector.shape_cast %295 : vector<8x128xf32> to vector<1x8x128xf32>
      %c0_15 = arith.constant 0 : index
      %c0_16 = arith.constant 0 : index
      %c0_17 = arith.constant 0 : index
      %297 = vector.load %arg3[%c0_15, %c0_16, %c0_17] : memref<1x8x128xf32, #tpu.memory_space<vmem>>, vector<1x8x128xf32>
      tpu.vector_store %arg3[%c0_15, %c0_16, %c0_17], %296 {strides = array<i32>} : memref<1x8x128xf32, #tpu.memory_space<vmem>>, vector<1x8x128xf32>,
    } else {
    }
    return
  }
  func.func @transform_0(%arg0: i32, %arg1: i32) -> (i32, i32, i32) {
    %c1_i32 = arith.constant 1 : i32
    %0 = arith.muli %arg0, %c1_i32 : i32
    %1 = arith.addi %0, %arg1 : i32
    %c0_i32 = arith.constant 0 : i32
    %c0_i32_0 = arith.constant 0 : i32
    %c0_i32_1 = arith.constant 0 : i32
    return %c0_i32, %1, %c0_i32_0 : i32, i32, i32
  }
  func.func @transform_1(%arg0: i32, %arg1: i32) -> (i32, i32, i32) {
    %c0_i32 = arith.constant 0 : i32
    %c0_i32_0 = arith.constant 0 : i32
    %c0_i32_1 = arith.constant 0 : i32
    return %arg0, %c0_i32, %c0_i32_0 : i32, i32, i32
  }
}

</mosaic_0001>

<llo_original>
// kernel: tpu_custom_call.1
$region0: #{tpu_custom_call.1}
  #allocation0 [shape = 'u32[]', space=smem, size = 0x4, offset = 0x4, fixed_abs, tag = 'smem constant byte address 0x4 - core index']
  #allocation1 [shape = 'u32[72,128]{1,0:T(1,128)}', space=vmem, size = 0x9000, scoped, tag = 'internal scratch']
  #allocation2 [shape = 'f32[8,128]{1,0:T(8,128)}', space=vmem, size = 0x1000, scoped, tag = 'scratch operand']
  %s0 = inlined_call_operand.hbm [shape: f32[12,16,128], index: 0, kind: input, shape index: {}]
  %s1 = inlined_call_operand.hbm [shape: f32[2,8,128], index: 1, kind: output, shape index: {}]
  %s2 = sld [smem:[#allocation0]]
  $region49: #{tpu_custom_call.1} parent=0
    _
  %s4 = ssub.s32 1, %s2
  %s5 = scalar_select 0, %s4, %s2
  $region1: #{tpu_custom_call.1} parent=0
    #allocation3 [shape = 'u8[98304]{0}', space=vmem, size = 0x18000, scoped, tag = 'input window, operand 0']
    #allocation4 [shape = 's32[2]{0}', space=sflag, size = 0x8, scoped, tag = 'scoped memory for tpu_custom_call.1']
    #allocation5 [shape = 's32[2]{0}', space=sflag, size = 0x8, scoped, tag = 'scoped memory for tpu_custom_call.1']
    #allocation6 [shape = 'u8[8192]{0}', space=vmem, size = 0x2000, scoped, tag = 'output window, operand 0']
    %6 = vsyncpa [#allocation4], 0
    %s7 = scalar_lea.sflag [#allocation4], 1
    %8 = vsyncpa %s7, 0
    %9 = vsyncpa [#allocation5], 0
    %s10 = scalar_lea.sflag [#allocation5], 1
    %11 = vsyncpa %s10, 0
    loop: start=0, step=1, limit=4
    $region2: #{tpu_custom_call.1} parent=1 // loop_pre_header
      _
    $region3: #{tpu_custom_call.1} parent=1 // loop_header
      %s13 = sphi 0, %s17
      %p14 = scmp.ge.s32.totalorder %s13, 4
      %s20 = sphi 0, %s32
      %s21 = sphi 0, %s28
      %s22 = sphi 0, %s20
      %s23 = sphi 0, %s21
      %s24 = sphi 0, %s22
      %s25 = sphi 0, %s23
      %s37 = sphi 0, %s39
      %s40 = sphi 0, %s37
      %s41 = sphi 0, %s40
      %s57 = sphi 0, %s41
      %s63 = sphi 0, %s65
      %s66 = sphi 0, %s63
      %s67 = sphi 0, %s66
      %s83 = sphi 0, %s67
    $region4: #{tpu_custom_call.1} parent=1 // loop_header_branch
      %16 = sbr.rel (%p14) target = $region8
    $region5: #{tpu_custom_call.1} parent=1 // loop_body
      %s18 = ssub.s32 %s13, 1
      %s19 = ssub.s32 %s13, 2
      %s26 = sadd.s32 1, %s21
      %p27 = scmp.ge.s32.totalorder %s26, 1
      %s28 = scalar_select %p27, 0, %s26
      %s29 = sadd.s32 1, %s20
      %s30 = scalar_select %p27, %s29, %s20
      %p31 = scmp.ge.s32.totalorder %s30, 2
      %s32 = scalar_select %p31, 0, %s30
      %s33 = sadd.s32 %s20, %s21
      %s34 = sadd.s32 %s32, %s28
      %s35 = ssub.s32 %s33, %s34
      %p36 = scmp.eq.s32.totalorder %s35, 0
      %s38 = sadd.s32 %s37, 1
      %s39 = scalar_select %p36, %s37, %s38
      %p42 = pneg %p36
      %p43 = scmp.eq.s32.totalorder %s13, 1
      %p44 = por %p42, %p43
      %p45 = scmp.ne.s32.totalorder %s37, %s40
      %p46 = scmp.eq.s32.totalorder %s13, 0
      %p47 = por %p45, %p46
      %p48 = scmp.ne.s32.totalorder %s37, %s40
      %p49 = scmp.eq.s32.totalorder %s18, 1
      %p50 = por %p48, %p49
      %p51 = scmp.ne.s32.totalorder %s40, %s41
      %p52 = scmp.eq.s32.totalorder %s18, 0
      %p53 = por %p51, %p52
      %p54 = scmp.ne.s32.totalorder %s40, %s41
      %p55 = scmp.eq.s32.totalorder %s19, 1
      %p56 = por %p54, %p55
      %p58 = scmp.ne.s32.totalorder %s41, %s57
      %p59 = scmp.eq.s32.totalorder %s19, 0
      %p60 = por %p58, %p59
      %s61 = ssub.s32 %s20, %s32
      %p62 = scmp.eq.s32.totalorder %s61, 0
      %s64 = sadd.s32 %s63, 1
      %s65 = scalar_select %p62, %s63, %s64
      %p68 = pneg %p62
      %p69 = scmp.eq.s32.totalorder %s13, 1
      %p70 = por %p68, %p69
      %p71 = scmp.ne.s32.totalorder %s63, %s66
      %p72 = scmp.eq.s32.totalorder %s13, 0
      %p73 = por %p71, %p72
      %p74 = scmp.ne.s32.totalorder %s63, %s66
      %p75 = scmp.eq.s32.totalorder %s18, 1
      %p76 = por %p74, %p75
      %p77 = scmp.ne.s32.totalorder %s66, %s67
      %p78 = scmp.eq.s32.totalorder %s18, 0
      %p79 = por %p77, %p78
      %p80 = scmp.ne.s32.totalorder %s66, %s67
      %p81 = scmp.eq.s32.totalorder %s19, 1
      %p82 = por %p80, %p81
      %p84 = scmp.ne.s32.totalorder %s67, %s83
      %p85 = scmp.eq.s32.totalorder %s19, 0
      %p86 = por %p84, %p85
      %p87 = scmp.le.s32.totalorder 1, %s13
      %p88 = scmp.lt.s32.totalorder %s13, 3
      %p89 = pnand %p87, %p88
      %p90 = pneg %p89
      // Predicated region
      $region9: #{tpu_custom_call.1} parent=5 // pred_check
        _
      $region10: #{tpu_custom_call.1} parent=5 // pred_check_branch
        %92 = sbr.rel (%p89) target = $region12
      $region11: #{tpu_custom_call.1} parent=5 // pred_region
        %s93 = ssub.s32 %s13, 1
      $region12: #{tpu_custom_call.1} parent=5 // pred_fallthru
        _
      %p94 = scmp.lt.s32.totalorder %s13, 2
      // Predicated region
      $region13: #{tpu_custom_call.1} parent=5 // pred_check
        %p95 = pneg %p94
      $region14: #{tpu_custom_call.1} parent=5 // pred_check_branch
        %97 = sbr.rel (%p95) target = $region16
      $region15: #{tpu_custom_call.1} parent=5 // pred_region
        // Predicated region
        $region17: #{tpu_custom_call.1} parent=15 // pred_check
          %p98 = pneg %p47
        $region18: #{tpu_custom_call.1} parent=15 // pred_check_branch
          %100 = sbr.rel (%p98) target = $region20
        $region19: #{tpu_custom_call.1} parent=15 // pred_region
          %s101 = sand.u32 %s37, 1
          %s102 = scalar_lea.sflag [#allocation4], %s101
          %s103 = sand.u32 %s37, 1
          %s104 = smul.addr %s103, 96
          %s105 = scalar_lea.vmem [#allocation3], %s104
          %s106 = sadd.s32 %s20, %s21
          %108 = vsyncadd %s102, 0
          %s109 = smul.addr %s106, 8
          %s110 = scalar_lea.hbm %s0, %s109
          %s111 = sshll.u32 %s110, 4
          %s112 = int_to_ptr.hbm [resolvable:$true] %s111
          %s113 = sshll.u32 %s105, 4
          %s114 = int_to_ptr.vmem [resolvable:$true] %s113
          %119 = dma.hbm_to_vmem [thread:$0]  %s112, 1536, %s114, %s102, 256, 128, 8
        $region20: #{tpu_custom_call.1} parent=15 // pred_fallthru
          _
      $region16: #{tpu_custom_call.1} parent=5 // pred_fallthru
        _
      %p120 = scmp.le.s32.totalorder 1, %s13
      %p121 = scmp.lt.s32.totalorder %s13, 3
      %p122 = pnand %p120, %p121
      %p123 = pneg %p122
      // Predicated region
      $region21: #{tpu_custom_call.1} parent=5 // pred_check
        _
      $region22: #{tpu_custom_call.1} parent=5 // pred_check_branch
        %125 = sbr.rel (%p122) target = $region24
      $region23: #{tpu_custom_call.1} parent=5 // pred_region
        %s126 = ssub.s32 %s13, 1
        %s127 = sand.u32 %s40, 1
        %s128 = scalar_lea.sflag [#allocation4], %s127
        %s129 = sand.u32 %s40, 1
        %s130 = smul.addr %s129, 96
        %s131 = scalar_lea.vmem [#allocation3], %s130
        // Predicated region
        $region25: #{tpu_custom_call.1} parent=23 // pred_check
          %p132 = pneg %p53
        $region26: #{tpu_custom_call.1} parent=23 // pred_check_branch
          %134 = sbr.rel (%p132) target = $region28
        $region27: #{tpu_custom_call.1} parent=23 // pred_region
          %136 = dma.done %s128, 1536
        $region28: #{tpu_custom_call.1} parent=23 // pred_fallthru
          _
        %s137 = sand.u32 %s40, 1
        %s138 = scalar_lea.sflag [#allocation4], %s137
        %s139 = sand.u32 %s40, 1
        %s140 = smul.addr %s139, 96
        %s141 = scalar_lea.vmem [#allocation3], %s140
        %p142 = pneg %p53
        %p143 = pneg %p50
        %p144 = pneg %p79
        %p145 = pneg %p76
        %s146 = sand.u32 %s66, 1
        %s147 = scalar_lea.sflag [#allocation5], %s146
        %s148 = sand.u32 %s66, 1
        %s149 = smul.addr %s148, 8
        %s150 = scalar_lea.vmem [#allocation6], %s149
        %s151 = sadd.s32 %s22, %s23
        %p152 = scmp.eq.s32.totalorder %s23, 0
        // Predicated region
        $region29: #{tpu_custom_call.1} parent=23 // pred_check
          %p153 = pneg %p152
        $region30: #{tpu_custom_call.1} parent=23 // pred_check_branch
          %155 = sbr.rel (%p153) target = $region32
        $region31: #{tpu_custom_call.1} parent=23 // pred_region
          %156 = vst [vmem:[#allocation2] sm:$0xff] 0.0
        $region32: #{tpu_custom_call.1} parent=23 // pred_fallthru
          _
        %v157 = vld [vmem:[%s131] sm:$0xff]
        %v158 = vld [vmem:[%s131 + $0x8] sm:$0xff]
        %v159 = vld [vmem:[%s131 + $0x10] sm:$0xff]
        %v160 = vld [vmem:[%s131 + $0x18] sm:$0xff]
        %v161 = vld [vmem:[%s131 + $0x20] sm:$0xff]
        %v162 = vld [vmem:[%s131 + $0x28] sm:$0xff]
        %v163 = vld [vmem:[%s131 + $0x30] sm:$0xff]
        %v164 = vld [vmem:[%s131 + $0x38] sm:$0xff]
        %v165 = vld [vmem:[%s131 + $0x40] sm:$0xff]
        %v166 = vld [vmem:[%s131 + $0x48] sm:$0xff]
        %v167 = vld [vmem:[%s131 + $0x50] sm:$0xff]
        %v168 = vld [vmem:[%s131 + $0x58] sm:$0xff]
        %v169 = vsub.f32 %v160, %v157
        %v170 = vsub.f32 %v161, %v158
        %v171 = vsub.f32 %v162, %v159
        %v172 = vsub.f32 %v163, %v157
        %v173 = vsub.f32 %v164, %v158
        %v174 = vsub.f32 %v165, %v159
        %v175 = vsub.f32 %v166, %v157
        %v176 = vsub.f32 %v167, %v158
        %v177 = vsub.f32 %v168, %v159
        %v178 = vmul.f32 %v170, %v174
        %v179 = vmul.f32 %v171, %v173
        %v180 = vsub.f32 %v178, %v179
        %v181 = vmul.f32 %v171, %v172
        %v182 = vmul.f32 %v169, %v174
        %v183 = vsub.f32 %v181, %v182
        %v184 = vmul.f32 %v169, %v173
        %v185 = vmul.f32 %v170, %v172
        %v186 = vsub.f32 %v184, %v185
        %v187 = vmul.f32 %v180, %v180
        %v188 = vmul.f32 %v183, %v183
        %v189 = vadd.f32 %v187, %v188
        %v190 = vmul.f32 %v186, %v186
        %v191 = vadd.f32 %v189, %v190
        %v192 = vrsqrt.pop %v191
        %v193 = vmul.f32 %v192, %v191
        %v194 = vmul.f32 %v193, %v192
        %v195 = vmul.f32 0.5, %v194
        %v196 = vsub.f32 1.5, %v195
        %v197 = vmul.f32 %v192, %v196
        %v198 = vmul.f32 %v191, %v197
        %vm199 = vcmp.eq.f32.partialorder %v191, inf
        %v200 = vsel %vm199, %v191, %v198
        %vm201 = vcmp.eq.f32.partialorder %v191, 0.0
        %v202 = vand.u32 %v191, 2147483648
        %v203 = vsel %vm201, %v202, %v200
        %v204 = vadd.f32 %v203, 1e-06
        %v205 = vrcp.pop %v204
        %v206 = vmul.f32 %v204, %v205
        %v207 = vsub.f32 1.0, %v206
        %v208 = vmul.f32 %v205, %v207
        %v209 = vadd.f32 %v205, %v208
        %vm210 = vweird.f32 %v204
        %vm211 = vweird.f32 %v205
        %vm212 = vmor %vm210, %vm211
        %v213 = vsel %vm212, %v205, %v209
        %v214 = vand.u32 2147483647, %v204
        %vm215 = vcmp.eq.f32.partialorder %v214, 8.507059e+37
        %v216 = vand.u32 %v204, 2147483648
        %v217 = vor.u32 1.1754944e-38, %v216
        %v218 = vsel %vm215, %v217, %v213
        %v219 = vmul.f32 %v180, %v175
        %v220 = vmul.f32 %v183, %v176
        %v221 = vadd.f32 %v219, %v220
        %v222 = vmul.f32 %v186, %v177
        %v223 = vadd.f32 %v221, %v222
        %v224 = vmul.f32 %v223, %v218
        %v225 = vmul.f32 %v224, %v224
        %v226 = vadd.f32 %v225, 0.0
        %v227 = vsub.f32 %v163, %v160
        %v228 = vsub.f32 %v164, %v161
        %v229 = vsub.f32 %v165, %v162
        %v230 = vsub.f32 %v166, %v160
        %v231 = vsub.f32 %v167, %v161
        %v232 = vsub.f32 %v168, %v162
        %v233 = vsub.f32 %v157, %v160
        %v234 = vsub.f32 %v158, %v161
        %v235 = vsub.f32 %v159, %v162
        %v236 = vmul.f32 %v228, %v232
        %v237 = vmul.f32 %v229, %v231
        %v238 = vsub.f32 %v236, %v237
        %v239 = vmul.f32 %v229, %v230
        %v240 = vmul.f32 %v227, %v232
        %v241 = vsub.f32 %v239, %v240
        %v242 = vmul.f32 %v227, %v231
        %v243 = vmul.f32 %v228, %v230
        %v244 = vsub.f32 %v242, %v243
        %v245 = vmul.f32 %v238, %v238
        %v246 = vmul.f32 %v241, %v241
        %v247 = vadd.f32 %v245, %v246
        %v248 = vmul.f32 %v244, %v244
        %v249 = vadd.f32 %v247, %v248
        %v250 = vrsqrt.pop %v249
        %v251 = vmul.f32 %v250, %v249
        %v252 = vmul.f32 %v251, %v250
        %v253 = vmul.f32 0.5, %v252
        %v254 = vsub.f32 1.5, %v253
        %v255 = vmul.f32 %v250, %v254
        %v256 = vmul.f32 %v249, %v255
        %vm257 = vcmp.eq.f32.partialorder %v249, inf
        %v258 = vsel %vm257, %v249, %v256
        %vm259 = vcmp.eq.f32.partialorder %v249, 0.0
        %v260 = vand.u32 %v249, 2147483648
        %v261 = vsel %vm259, %v260, %v258
        %v262 = vadd.f32 %v261, 1e-06
        %v263 = vrcp.pop %v262
        %v264 = vmul.f32 %v262, %v263
        %v265 = vsub.f32 1.0, %v264
        %v266 = vmul.f32 %v263, %v265
        %v267 = vadd.f32 %v263, %v266
        %vm268 = vweird.f32 %v262
        %vm269 = vweird.f32 %v263
        %vm270 = vmor %vm268, %vm269
        %v271 = vsel %vm270, %v263, %v267
        %v272 = vand.u32 2147483647, %v262
        %vm273 = vcmp.eq.f32.partialorder %v272, 8.507059e+37
        %v274 = vand.u32 %v262, 2147483648
        %v275 = vor.u32 1.1754944e-38, %v274
        %v276 = vsel %vm273, %v275, %v271
        %v277 = vmul.f32 %v238, %v233
        %v278 = vmul.f32 %v241, %v234
        %v279 = vadd.f32 %v277, %v278
        %v280 = vmul.f32 %v244, %v235
        %v281 = vadd.f32 %v279, %v280
        %v282 = vmul.f32 %v281, %v276
        %v283 = vmul.f32 %v282, %v282
        %v284 = vadd.f32 %v226, %v283
        %v285 = vsub.f32 %v166, %v163
        %v286 = vsub.f32 %v167, %v164
        %v287 = vsub.f32 %v168, %v165
        %v288 = vsub.f32 %v157, %v163
        %v289 = vsub.f32 %v158, %v164
        %v290 = vsub.f32 %v159, %v165
        %v291 = vsub.f32 %v160, %v163
        %v292 = vsub.f32 %v161, %v164
        %v293 = vsub.f32 %v162, %v165
        %v294 = vmul.f32 %v286, %v290
        %v295 = vmul.f32 %v287, %v289
        %v296 = vsub.f32 %v294, %v295
        %v297 = vmul.f32 %v287, %v288
        %v298 = vmul.f32 %v285, %v290
        %v299 = vsub.f32 %v297, %v298
        %v300 = vmul.f32 %v285, %v289
        %v301 = vmul.f32 %v286, %v288
        %v302 = vsub.f32 %v300, %v301
        %v303 = vmul.f32 %v296, %v296
        %v304 = vmul.f32 %v299, %v299
        %v305 = vadd.f32 %v303, %v304
        %v306 = vmul.f32 %v302, %v302
        %v307 = vadd.f32 %v305, %v306
        %v308 = vrsqrt.pop %v307
        %v309 = vmul.f32 %v308, %v307
        %v310 = vmul.f32 %v309, %v308
        %v311 = vmul.f32 0.5, %v310
        %v312 = vsub.f32 1.5, %v311
        %v313 = vmul.f32 %v308, %v312
        %v314 = vmul.f32 %v307, %v313
        %vm315 = vcmp.eq.f32.partialorder %v307, inf
        %v316 = vsel %vm315, %v307, %v314
        %vm317 = vcmp.eq.f32.partialorder %v307, 0.0
        %v318 = vand.u32 %v307, 2147483648
        %v319 = vsel %vm317, %v318, %v316
        %v320 = vadd.f32 %v319, 1e-06
        %v321 = vrcp.pop %v320
        %v322 = vmul.f32 %v320, %v321
        %v323 = vsub.f32 1.0, %v322
        %v324 = vmul.f32 %v321, %v323
        %v325 = vadd.f32 %v321, %v324
        %vm326 = vweird.f32 %v320
        %vm327 = vweird.f32 %v321
        %vm328 = vmor %vm326, %vm327
        %v329 = vsel %vm328, %v321, %v325
        %v330 = vand.u32 2147483647, %v320
        %vm331 = vcmp.eq.f32.partialorder %v330, 8.507059e+37
        %v332 = vand.u32 %v320, 2147483648
        %v333 = vor.u32 1.1754944e-38, %v332
        %v334 = vsel %vm331, %v333, %v329
        %v335 = vmul.f32 %v296, %v291
        %v336 = vmul.f32 %v299, %v292
        %v337 = vadd.f32 %v335, %v336
        %v338 = vmul.f32 %v302, %v293
        %v339 = vadd.f32 %v337, %v338
        %v340 = vmul.f32 %v339, %v334
        %v341 = vmul.f32 %v340, %v340
        %v342 = vadd.f32 %v284, %v341
        %v343 = vsub.f32 %v157, %v166
        %v344 = vsub.f32 %v158, %v167
        %v345 = vsub.f32 %v159, %v168
        %v346 = vsub.f32 %v160, %v166
        %v347 = vsub.f32 %v161, %v167
        %v348 = vsub.f32 %v162, %v168
        %v349 = vsub.f32 %v163, %v166
        %v350 = vsub.f32 %v164, %v167
        %v351 = vsub.f32 %v165, %v168
        %v352 = vmul.f32 %v344, %v348
        %v353 = vmul.f32 %v345, %v347
        %v354 = vsub.f32 %v352, %v353
        %v355 = vmul.f32 %v345, %v346
        %v356 = vmul.f32 %v343, %v348
        %v357 = vsub.f32 %v355, %v356
        %v358 = vmul.f32 %v343, %v347
        %v359 = vmul.f32 %v344, %v346
        %v360 = vsub.f32 %v358, %v359
        %v361 = vmul.f32 %v354, %v354
        %v362 = vmul.f32 %v357, %v357
        %v363 = vadd.f32 %v361, %v362
        %v364 = vmul.f32 %v360, %v360
        %v365 = vadd.f32 %v363, %v364
        %v366 = vrsqrt.pop %v365
        %v367 = vmul.f32 %v366, %v365
        %v368 = vmul.f32 %v367, %v366
        %v369 = vmul.f32 0.5, %v368
        %v370 = vsub.f32 1.5, %v369
        %v371 = vmul.f32 %v366, %v370
        %v372 = vmul.f32 %v365, %v371
        %vm373 = vcmp.eq.f32.partialorder %v365, inf
        %v374 = vsel %vm373, %v365, %v372
        %vm375 = vcmp.eq.f32.partialorder %v365, 0.0
        %v376 = vand.u32 %v365, 2147483648
        %v377 = vsel %vm375, %v376, %v374
        %v378 = vadd.f32 %v377, 1e-06
        %v379 = vrcp.pop %v378
        %v380 = vmul.f32 %v378, %v379
        %v381 = vsub.f32 1.0, %v380
        %v382 = vmul.f32 %v379, %v381
        %v383 = vadd.f32 %v379, %v382
        %vm384 = vweird.f32 %v378
        %vm385 = vweird.f32 %v379
        %vm386 = vmor %vm384, %vm385
        %v387 = vsel %vm386, %v379, %v383
        %v388 = vand.u32 2147483647, %v378
        %vm389 = vcmp.eq.f32.partialorder %v388, 8.507059e+37
        %v390 = vand.u32 %v378, 2147483648
        %v391 = vor.u32 1.1754944e-38, %v390
        %v392 = vsel %vm389, %v391, %v387
        %v393 = vmul.f32 %v354, %v349
        %v394 = vmul.f32 %v357, %v350
        %v395 = vadd.f32 %v393, %v394
        %v396 = vmul.f32 %v360, %v351
        %v397 = vadd.f32 %v395, %v396
        %v398 = vmul.f32 %v397, %v392
        %v399 = vmul.f32 %v398, %v398
        %v400 = vadd.f32 %v342, %v399
        %v401 = vld [vmem:[#allocation2] sm:$0xff]
        %v402 = vadd.f32 %v401, %v400
        %403 = vst [vmem:[#allocation2] sm:$0xff] %v402
        // Predicated region
        $region33: #{tpu_custom_call.1} parent=23 // pred_check
          %p404 = pneg %p152
        $region34: #{tpu_custom_call.1} parent=23 // pred_check_branch
          %406 = sbr.rel (%p404) target = $region36
        $region35: #{tpu_custom_call.1} parent=23 // pred_region
          %v407 = vld [vmem:[#allocation2] sm:$0xff]
          %408 = vst [vmem:[%s150] sm:$0xff] %v407
        $region36: #{tpu_custom_call.1} parent=23 // pred_fallthru
          _
        %s409 = sand.u32 %s66, 1
        %s410 = scalar_lea.sflag [#allocation5], %s409
        %s411 = sand.u32 %s66, 1
        %s412 = smul.addr %s411, 8
        %s413 = scalar_lea.vmem [#allocation6], %s412
        // Predicated region
        $region37: #{tpu_custom_call.1} parent=23 // pred_check
          %p414 = pneg %p76
        $region38: #{tpu_custom_call.1} parent=23 // pred_check_branch
          %416 = sbr.rel (%p414) target = $region40
        $region39: #{tpu_custom_call.1} parent=23 // pred_region
          %418 = vsyncadd %s410, 0
          %s419 = smul.addr %s22, 8
          %s420 = scalar_lea.hbm %s1, %s419
          %s422 = sshll.u32 %s413, 4
          %s423 = int_to_ptr.vmem [resolvable:$true] %s422
          %s424 = sshll.u32 %s420, 4
          %s425 = int_to_ptr.hbm [resolvable:$true] %s424
          %427 = dma.vmem_to_hbm [thread:$0]  %s423, 128, %s425, %s410
        $region40: #{tpu_custom_call.1} parent=23 // pred_fallthru
          _
      $region24: #{tpu_custom_call.1} parent=5 // pred_fallthru
        _
      %p428 = scmp.le.s32.totalorder 2, %s13
      // Predicated region
      $region41: #{tpu_custom_call.1} parent=5 // pred_check
        %p429 = pneg %p428
      $region42: #{tpu_custom_call.1} parent=5 // pred_check_branch
        %431 = sbr.rel (%p429) target = $region44
      $region43: #{tpu_custom_call.1} parent=5 // pred_region
        %s432 = ssub.s32 %s13, 2
        // Predicated region
        $region45: #{tpu_custom_call.1} parent=43 // pred_check
          %p433 = pneg %p82
        $region46: #{tpu_custom_call.1} parent=43 // pred_check_branch
          %435 = sbr.rel (%p433) target = $region48
        $region47: #{tpu_custom_call.1} parent=43 // pred_region
          %s436 = sand.u32 %s67, 1
          %s437 = scalar_lea.sflag [#allocation5], %s436
          %s438 = sand.u32 %s67, 1
          %s439 = smul.addr %s438, 8
          %s440 = scalar_lea.vmem [#allocation6], %s439
          %442 = dma.done %s437, 128
        $region48: #{tpu_custom_call.1} parent=43 // pred_fallthru
          _
      $region44: #{tpu_custom_call.1} parent=5 // pred_fallthru
        _
    $region6: #{tpu_custom_call.1} parent=1 // loop_footer
      %s17 = sadd.s32 1, %s13
    $region7: #{tpu_custom_call.1} parent=1 // loop_footer_branch
      %12 = sbr.rel target = $region3
    $region8: #{tpu_custom_call.1} parent=1 // loop_exit
      _
    %443 = vsyncpa [#allocation4], 1
    %s444 = scalar_lea.sflag [#allocation4], 1
    %445 = vsyncpa %s444, 1
    %446 = vsyncpa [#allocation5], 1
    %s447 = scalar_lea.sflag [#allocation5], 1
    %448 = vsyncpa %s447, 1

</llo_original>
